<compile_context>
chip_gen: v7x
topology: tpu7x:2x2x1
jax: 0.10.0
libtpu: 0.0.40
codegen_flags: <defaults>
</compile_context>

<pallas_src>
import jax
import jax.numpy as jnp
from jax import lax
from jax.experimental import pallas as pl
from jax.experimental.pallas import tpu as pltpu


_PHASES = ((0, 0), (0, 1), (1, 0), (1, 1))

# Valid input shifts (dh, dw) per output phase (ph, pw).  The ConvTranspose tap
# used is kh = ph - 2*dh + 1, kw = pw - 2*dw + 1 (kernel=4, stride=2, pad=1).
_PHASE_SHIFTS = {
    (0, 0): ((0, 0), (0, -1), (-1, 0), (-1, -1)),
    (0, 1): ((0, 0), (0, 1), (-1, 0), (-1, 1)),
    (1, 0): ((0, 0), (0, -1), (1, 0), (1, -1)),
    (1, 1): ((0, 0), (0, 1), (1, 0), (1, 1)),
}


def _kidx(phase_bit, shift):
    """ConvTranspose kernel index for an output phase bit and input shift."""
    return phase_bit - 2 * shift + 1


# ----------------------------------------------------------------------------
# Kernels
# ----------------------------------------------------------------------------
def _fused_kernel(x_ref, w_ref, b_ref, o_ref, xcat_ref):
    # x_ref   : (1, 1, TH+2, W+2, Cin)  halo'd input window (compute dtype)
    # w_ref   : (9*Cin, 4*Cout)         zero-padded shift x phase packed weights
    # b_ref   : (1, 4*Cout)             per-phase tiled bias (f32)
    # o_ref   : (1, TH*W, 4*Cout)       lane-dense, phase-packed output (f32)
    # xcat_ref: (TH*W, 9*Cin)           im2col scratch (compute dtype)
    _, _, thp2, wp2, cin = x_ref.shape
    th, w_sp = thp2 - 2, wp2 - 2
    rows = th * w_sp

    # im2col: 9 shifted windows packed along lanes, written straight from
    # x_ref views into the scratch (no hoisted intermediate arrays).
    for sh in range(3):
        for sw in range(3):
            s = sh * 3 + sw
            xcat_ref[:, s * cin:(s + 1) * cin] = (
                x_ref[0, 0, sh:sh + th, sw:sw + w_sp, :].reshape(rows, cin))

    # One MXU matmul (K = 9*Cin) produces all 4 output phases at once.
    acc = jnp.dot(xcat_ref[...], w_ref[...], preferred_element_type=jnp.float32)
    # Bias broadcasts implicitly in the add; ReLU; lane-dense store.
    o_ref[0] = jnp.maximum(acc + b_ref[...], 0.0).astype(o_ref.dtype)


def _phase_kernel(x_ref, w_ref, b_ref, o_ref, xcat_ref):
    # Large-Cin fallback: 4 per-phase dots with a ping-pong im2col scratch so
    # the next phase's stores overlap the current phase's matmul.
    # x_ref   : (1, 1, TH+2, W+2, Cin)
    # w_ref   : (4, 4*Cin, Cout)
    # b_ref   : (1, 4*Cout)
    # o_ref   : (1, TH*W, 4*Cout)
    # xcat_ref: (2, TH*W, 4*Cin)
    _, _, thp2, wp2, cin = x_ref.shape
    th, w_sp = thp2 - 2, wp2 - 2
    rows = th * w_sp
    cout = w_ref.shape[-1]

    for p, phase in enumerate(_PHASES):
        slot = p & 1
        for t, (dh, dw) in enumerate(_PHASE_SHIFTS[phase]):
            sh, sw = dh + 1, dw + 1
            xcat_ref[slot, :, t * cin:(t + 1) * cin] = (
                x_ref[0, 0, sh:sh + th, sw:sw + w_sp, :].reshape(rows, cin))
        acc = jnp.dot(xcat_ref[slot], w_ref[p],
                      preferred_element_type=jnp.float32)
        o_ref[0, :, p * cout:(p + 1) * cout] = jnp.maximum(
            acc + b_ref[:, p * cout:(p + 1) * cout], 0.0).astype(o_ref.dtype)


# ----------------------------------------------------------------------------
# Sizing helpers
# ----------------------------------------------------------------------------
def _vmem_budget():
    """Scoped-VMEM budget: chip capacity minus ~16 MiB compiler headroom
    (-> ~48 MiB on v7x's 64 MiB VMEM, ~112 MiB on v5e/v6e's 128 MiB)."""
    try:
        cap = int(pltpu.get_tpu_info().vmem_capacity_bytes)
    except Exception:
        cap = 64 << 20  # conservative (v7x-sized) fallback
    return int(max(cap - (16 << 20), 24 << 20))


def _pick_row_tile(H, W, Cin, Cout, fused, itemsize, budget_bytes):
    """Largest TH dividing H whose per-step working set fits the VMEM budget
    (in/out double-buffered, params single-buffered, + in-flight slack)."""
    best = None
    for th in range(1, H + 1):
        if H % th:
            continue
        if th < H and (th * W) % 8:
            continue  # row-tiled output block must keep sublane multiple of 8
        in_b = (th + 2) * (W + 2) * Cin * itemsize
        out_b = th * W * 4 * Cout * 4
        if fused:
            w_b = 9 * Cin * 4 * Cout * itemsize
            sc_b = th * W * 9 * Cin * itemsize
        else:
            w_b = 4 * 4 * Cin * Cout * itemsize
            sc_b = 2 * th * W * 4 * Cin * itemsize
        slack = th * W * Cin * itemsize + out_b  # one im2col slice + f32 acc
        est = 2 * (in_b + out_b) + w_b + sc_b + slack
        if est <= budget_bytes:
            best = th
    if best is None:  # nothing fits: smallest legal tile
        best = next(th for th in range(1, H + 1)
                    if H % th == 0 and (th == H or (th * W) % 8 == 0))
    return best


def _param_spec(block_shape, index_map, nbytes):
    """BlockSpec for a grid-invariant parameter block; single-buffered when it
    is large enough for the saved pipeline copy to matter for VMEM."""
    if nbytes >= (1 << 20):
        try:
            return pl.BlockSpec(block_shape, index_map,
                                pipeline_mode=pl.Buffered(1))
        except Exception:  # jax build without pipeline_mode support
            pass
    return pl.BlockSpec(block_shape, index_map)


# ----------------------------------------------------------------------------
# Wrapper
# ----------------------------------------------------------------------------
def transpose_convolution_block(x1, skip_input, weight, bias, *,
                                row_tile=None, compute_dtype=jnp.bfloat16,
                                fuse_phases=None):
    """Forward pass of TransposeConvolutionBlock (no norm / dropout, ReLU).

    x1:         (N, Cin, H, W)        NCHW float32
    skip_input: (N, Cskip, 2H, 2W)    NCHW float32
    weight:     (Cin, Cout, 4, 4)     PyTorch ConvTranspose2d weight layout
    bias:       (Cout,)
    returns     (N, Cout + Cskip, 2H, 2W) float32
    """
    N, Cin, H, W = x1.shape
    Cout = weight.shape[1]

    if fuse_phases is None:
        # The zero-padded K=9*Cin dot is free while K stays well under the MXU
        # depth (256 on v6e/v7x; on v5e's 128-deep MXU prefer Cin < 32).
        fuse_phases = Cin < 64
    itemsize = jnp.dtype(compute_dtype).itemsize

    budget = _vmem_budget()
    if row_tile is None:
        row_tile = _pick_row_tile(H, W, Cin, Cout, fuse_phases, itemsize, budget)
    TH = int(row_tile)
    assert H % TH == 0, (H, TH)
    if TH < H:
        assert (TH * W) % 8 == 0, "row-tiled output block needs TH*W % 8 == 0"
    n_tiles = H // TH

    # ---- input glue: NCHW -> NHWC, zero-pad by 1, overlapping (TH+2)-row halo
    # windows (only (TH+2)/TH duplication vs 3x for row-shifted stacking).
    x_nhwc = jnp.transpose(x1, (0, 2, 3, 1)).astype(compute_dtype)
    xp = jnp.pad(x_nhwc, ((0, 0), (1, 1), (1, 1), (0, 0)))   # (N, H+2, W+2, Cin)
    xs = jnp.stack([xp[:, i * TH:i * TH + TH + 2] for i in range(n_tiles)],
                   axis=1)                                   # (N, T, TH+2, W+2, Cin)

    # ---- packed weights / bias, pre-cast once in the wrapper ----
    w_hwio = jnp.transpose(weight, (2, 3, 0, 1)).astype(jnp.float32)  # (4,4,Cin,Cout)
    if fuse_phases:
        blocks = []
        for dh in (-1, 0, 1):
            for dw in (-1, 0, 1):
                cols = []
                for (ph, pw) in _PHASES:
                    kh, kw = _kidx(ph, dh), _kidx(pw, dw)
                    if 0 <= kh < 4 and 0 <= kw < 4:
                        cols.append(w_hwio[kh, kw])
                    else:
                        cols.append(jnp.zeros((Cin, Cout), jnp.float32))
                blocks.append(jnp.concatenate(cols, axis=1))  # (Cin, 4*Cout)
        w_pack = jnp.concatenate(blocks, axis=0).astype(compute_dtype)  # (9Cin, 4Cout)
        w_block = (9 * Cin, 4 * Cout)
        w_index = lambda n, i: (0, 0)
        scratch = pltpu.VMEM((TH * W, 9 * Cin), compute_dtype)
        kernel = _fused_kernel
    else:
        w_pack = jnp.stack([
            jnp.concatenate([w_hwio[_kidx(ph, dh), _kidx(pw, dw)]
                             for (dh, dw) in _PHASE_SHIFTS[(ph, pw)]], axis=0)
            for (ph, pw) in _PHASES], axis=0).astype(compute_dtype)  # (4, 4Cin, Cout)
        w_block = (4, 4 * Cin, Cout)
        w_index = lambda n, i: (0, 0, 0)
        scratch = pltpu.VMEM((2, TH * W, 4 * Cin), compute_dtype)
        kernel = _phase_kernel
    b_pack = jnp.tile(bias.astype(jnp.float32), 4).reshape(1, 4 * Cout)

    w_spec = _param_spec(w_block, w_index, w_pack.size * itemsize)
    b_spec = _param_spec((1, 4 * Cout), lambda n, i: (0, 0), b_pack.size * 4)

    out_flat = pl.pallas_call(
        kernel,
        out_shape=jax.ShapeDtypeStruct((N, H * W, 4 * Cout), jnp.float32),
        grid_spec=pltpu.PrefetchScalarGridSpec(
            num_scalar_prefetch=0,
            grid=(N, n_tiles),
            in_specs=[
                pl.BlockSpec((1, 1, TH + 2, W + 2, Cin),
                             lambda n, i: (n, i, 0, 0, 0)),
                w_spec,
                b_spec,
            ],
            out_specs=pl.BlockSpec((1, TH * W, 4 * Cout), lambda n, i: (n, i, 0)),
            scratch_shapes=[scratch],
        ),
        compiler_params=pltpu.CompilerParams(
            dimension_semantics=("parallel", "parallel"),
            vmem_limit_bytes=int(budget)),
    )(xs, w_pack, b_pack)

    # ---- epilogue: un-phase + NHWC->NCHW (one transpose) + channel concat ----
    # out_flat[n, h*W + w, (ph*2+pw)*Cout + c] == y[n, c, 2h+ph, 2w+pw]
    y = out_flat.reshape(N, H, W, 2, 2, Cout)
    y_nchw = jnp.transpose(y, (0, 5, 1, 3, 2, 4)).reshape(N, Cout, 2 * H, 2 * W)
    return jnp.concatenate([y_nchw, skip_input.astype(jnp.float32)], axis=1)


# ----------------------------------------------------------------------------
# Reference + self-check
# ----------------------------------------------------------------------------
def _reference(x1, skip_input, weight, bias):
    """Pure-JAX reference: ConvTranspose2d == lhs-dilated conv with flipped kernel."""
    k, s, p = 4, 2, 1
    w_lax = jnp.transpose(jnp.flip(weight, (2, 3)), (1, 0, 2, 3))  # OIHW
    y = lax.conv_general_dilated(
        x1, w_lax, window_strides=(1, 1),
        padding=[(k - 1 - p, k - 1 - p)] * 2,
        lhs_dilation=(s, s), rhs_dilation=(1, 1),
        dimension_numbers=("NCHW", "OIHW", "NCHW"))
    y = jnp.maximum(y + bias[None, :, None, None], 0.0)
    return jnp.concatenate([y, skip_input], axis=1)


if __name__ == "__main__":
    key = jax.random.PRNGKey(0)
    k1, k2, k3, k4 = jax.random.split(key, 4)

    N, Cin, Cout, Cskip, H, W = 2, 4, 4, 4, 8, 8
    x1 = jax.random.normal(k1, (N, Cin, H, W), jnp.float32)
    skip = jax.random.normal(k2, (N, Cskip, 2 * H, 2 * W), jnp.float32)

    bound = 1.0 / float(Cin * 4 * 4) ** 0.5
    weight = jax.random.uniform(k3, (Cin, Cout, 4, 4), jnp.float32, -bound, bound)
    bias = jax.random.uniform(k4, (Cout,), jnp.float32, -bound, bound)

    ref = _reference(x1, skip, weight, bias)

    # 1) Default path: fused single-dot, bf16 MXU operands, auto row tile.
    fwd_default = jax.jit(transpose_convolution_block)
    out = jax.block_until_ready(fwd_default(x1, skip, weight, bias))
    assert out.shape == (N, Cout + Cskip, 2 * H, 2 * W), out.shape
    if not jnp.allclose(out, ref, atol=5e-2, rtol=5e-2):
        raise AssertionError("Pallas kernel (fused, bf16) mismatch vs reference")

    # 2) Fused f32 path with explicit row tiling (grid = (N, 2)).
    fwd_f32 = jax.jit(lambda a, b, c, d: transpose_convolution_block(
        a, b, c, d, row_tile=4, compute_dtype=jnp.float32))
    out_f32 = jax.block_until_ready(fwd_f32(x1, skip, weight, bias))
    if not jnp.allclose(out_f32, ref, atol=1e-4, rtol=1e-4):
        raise AssertionError("Pallas kernel (fused, f32) mismatch vs reference")

    # 3) Per-phase fallback (large-Cin path) with ping-pong scratch, f32.
    fwd_phase = jax.jit(lambda a, b, c, d: transpose_convolution_block(
        a, b, c, d, row_tile=2, compute_dtype=jnp.float32, fuse_phases=False))
    out_ph = jax.block_until_ready(fwd_phase(x1, skip, weight, bias))
    if not jnp.allclose(out_ph, ref, atol=1e-4, rtol=1e-4):
        raise AssertionError("Pallas kernel (per-phase, f32) mismatch vs reference")

    print("KERNEL_OK")
</pallas_src>

<mosaic_0001>
module attributes {stable_mosaic.version = 11 : i64} {
  func.func @_fused_kernel(%arg0: i32, %arg1: i32, %arg2: memref<1x1x10x10x4xbf16, #tpu.memory_space<vmem>>, %arg3: memref<36x16xbf16, #tpu.memory_space<vmem>>, %arg4: memref<1x16xf32, #tpu.memory_space<vmem>>, %arg5: memref<1x64x16xf32, #tpu.memory_space<vmem>>, %arg6: memref<64x36xbf16, #tpu.memory_space<vmem>>) attributes {dimension_semantics = [#tpu.dimension_semantics<parallel>, #tpu.dimension_semantics<parallel>], iteration_bounds = array<i64: 2, 1>, scalar_prefetch = 0 : i64, scratch_operands = 1 : i64, tpu.core_type = #tpu.core_type<tc>, window_params = [{transform_indices = @transform_0, window_bounds = array<i64: 1, 1, 10, 10, 4>}, {pipeline_mode = #tpu.pipeline_mode<synchronous>, transform_indices = @transform_1, window_bounds = array<i64: 36, 16>}, {pipeline_mode = #tpu.pipeline_mode<synchronous>, transform_indices = @transform_2, window_bounds = array<i64: 1, 16>}, {transform_indices = @transform_3, window_bounds = array<i64: 1, 64, 16>}]} {
    %c0 = arith.constant 0 : index
    %c0_0 = arith.constant 0 : index
    %c0_1 = arith.constant 0 : index
    %c0_2 = arith.constant 0 : index
    %c0_3 = arith.constant 0 : index
    %0 = vector.load %arg2[%c0, %c0_0, %c0_1, %c0_2, %c0_3] : memref<1x1x10x10x4xbf16, #tpu.memory_space<vmem>>, vector<1x1x8x8x4xbf16>
    %1 = vector.shape_cast %0 : vector<1x1x8x8x4xbf16> to vector<8x8x4xbf16>
    %2 = vector.shape_cast %1 : vector<8x8x4xbf16> to vector<64x4xbf16>
    %c0_4 = arith.constant 0 : index
    %c0_5 = arith.constant 0 : index
    %3 = vector.load %arg6[%c0_4, %c0_5] : memref<64x36xbf16, #tpu.memory_space<vmem>>, vector<64x4xbf16>
    tpu.vector_store %arg6[%c0_4, %c0_5], %2 {strides = array<i32>} : memref<64x36xbf16, #tpu.memory_space<vmem>>, vector<64x4xbf16>,
    %c0_6 = arith.constant 0 : index
    %c0_7 = arith.constant 0 : index
    %c0_8 = arith.constant 0 : index
    %c1 = arith.constant 1 : index
    %c0_9 = arith.constant 0 : index
    %4 = vector.load %arg2[%c0_6, %c0_7, %c0_8, %c1, %c0_9] : memref<1x1x10x10x4xbf16, #tpu.memory_space<vmem>>, vector<1x1x8x8x4xbf16>
    %5 = vector.shape_cast %4 : vector<1x1x8x8x4xbf16> to vector<8x8x4xbf16>
    %6 = vector.shape_cast %5 : vector<8x8x4xbf16> to vector<64x4xbf16>
    %c0_10 = arith.constant 0 : index
    %c4 = arith.constant 4 : index
    %7 = vector.load %arg6[%c0_10, %c4] : memref<64x36xbf16, #tpu.memory_space<vmem>>, vector<64x4xbf16>
    tpu.vector_store %arg6[%c0_10, %c4], %6 {strides = array<i32>} : memref<64x36xbf16, #tpu.memory_space<vmem>>, vector<64x4xbf16>,
    %c0_11 = arith.constant 0 : index
    %c0_12 = arith.constant 0 : index
    %c0_13 = arith.constant 0 : index
    %c2 = arith.constant 2 : index
    %c0_14 = arith.constant 0 : index
    %8 = vector.load %arg2[%c0_11, %c0_12, %c0_13, %c2, %c0_14] : memref<1x1x10x10x4xbf16, #tpu.memory_space<vmem>>, vector<1x1x8x8x4xbf16>
    %9 = vector.shape_cast %8 : vector<1x1x8x8x4xbf16> to vector<8x8x4xbf16>
    %10 = vector.shape_cast %9 : vector<8x8x4xbf16> to vector<64x4xbf16>
    %c0_15 = arith.constant 0 : index
    %c8 = arith.constant 8 : index
    %11 = vector.load %arg6[%c0_15, %c8] : memref<64x36xbf16, #tpu.memory_space<vmem>>, vector<64x4xbf16>
    tpu.vector_store %arg6[%c0_15, %c8], %10 {strides = array<i32>} : memref<64x36xbf16, #tpu.memory_space<vmem>>, vector<64x4xbf16>,
    %c0_16 = arith.constant 0 : index
    %c0_17 = arith.constant 0 : index
    %c1_18 = arith.constant 1 : index
    %c0_19 = arith.constant 0 : index
    %c0_20 = arith.constant 0 : index
    %12 = vector.load %arg2[%c0_16, %c0_17, %c1_18, %c0_19, %c0_20] : memref<1x1x10x10x4xbf16, #tpu.memory_space<vmem>>, vector<1x1x8x8x4xbf16>
    %13 = vector.shape_cast %12 : vector<1x1x8x8x4xbf16> to vector<8x8x4xbf16>
    %14 = vector.shape_cast %13 : vector<8x8x4xbf16> to vector<64x4xbf16>
    %c0_21 = arith.constant 0 : index
    %c12 = arith.constant 12 : index
    %15 = vector.load %arg6[%c0_21, %c12] : memref<64x36xbf16, #tpu.memory_space<vmem>>, vector<64x4xbf16>
    tpu.vector_store %arg6[%c0_21, %c12], %14 {strides = array<i32>} : memref<64x36xbf16, #tpu.memory_space<vmem>>, vector<64x4xbf16>,
    %c0_22 = arith.constant 0 : index
    %c0_23 = arith.constant 0 : index
    %c1_24 = arith.constant 1 : index
    %c1_25 = arith.constant 1 : index
    %c0_26 = arith.constant 0 : index
    %16 = vector.load %arg2[%c0_22, %c0_23, %c1_24, %c1_25, %c0_26] : memref<1x1x10x10x4xbf16, #tpu.memory_space<vmem>>, vector<1x1x8x8x4xbf16>
    %17 = vector.shape_cast %16 : vector<1x1x8x8x4xbf16> to vector<8x8x4xbf16>
    %18 = vector.shape_cast %17 : vector<8x8x4xbf16> to vector<64x4xbf16>
    %c0_27 = arith.constant 0 : index
    %c16 = arith.constant 16 : index
    %19 = vector.load %arg6[%c0_27, %c16] : memref<64x36xbf16, #tpu.memory_space<vmem>>, vector<64x4xbf16>
    tpu.vector_store %arg6[%c0_27, %c16], %18 {strides = array<i32>} : memref<64x36xbf16, #tpu.memory_space<vmem>>, vector<64x4xbf16>,
    %c0_28 = arith.constant 0 : index
    %c0_29 = arith.constant 0 : index
    %c1_30 = arith.constant 1 : index
    %c2_31 = arith.constant 2 : index
    %c0_32 = arith.constant 0 : index
    %20 = vector.load %arg2[%c0_28, %c0_29, %c1_30, %c2_31, %c0_32] : memref<1x1x10x10x4xbf16, #tpu.memory_space<vmem>>, vector<1x1x8x8x4xbf16>
    %21 = vector.shape_cast %20 : vector<1x1x8x8x4xbf16> to vector<8x8x4xbf16>
    %22 = vector.shape_cast %21 : vector<8x8x4xbf16> to vector<64x4xbf16>
    %c0_33 = arith.constant 0 : index
    %c20 = arith.constant 20 : index
    %23 = vector.load %arg6[%c0_33, %c20] : memref<64x36xbf16, #tpu.memory_space<vmem>>, vector<64x4xbf16>
    tpu.vector_store %arg6[%c0_33, %c20], %22 {strides = array<i32>} : memref<64x36xbf16, #tpu.memory_space<vmem>>, vector<64x4xbf16>,
    %c0_34 = arith.constant 0 : index
    %c0_35 = arith.constant 0 : index
    %c2_36 = arith.constant 2 : index
    %c0_37 = arith.constant 0 : index
    %c0_38 = arith.constant 0 : index
    %24 = vector.load %arg2[%c0_34, %c0_35, %c2_36, %c0_37, %c0_38] : memref<1x1x10x10x4xbf16, #tpu.memory_space<vmem>>, vector<1x1x8x8x4xbf16>
    %25 = vector.shape_cast %24 : vector<1x1x8x8x4xbf16> to vector<8x8x4xbf16>
    %26 = vector.shape_cast %25 : vector<8x8x4xbf16> to vector<64x4xbf16>
    %c0_39 = arith.constant 0 : index
    %c24 = arith.constant 24 : index
    %27 = vector.load %arg6[%c0_39, %c24] : memref<64x36xbf16, #tpu.memory_space<vmem>>, vector<64x4xbf16>
    tpu.vector_store %arg6[%c0_39, %c24], %26 {strides = array<i32>} : memref<64x36xbf16, #tpu.memory_space<vmem>>, vector<64x4xbf16>,
    %c0_40 = arith.constant 0 : index
    %c0_41 = arith.constant 0 : index
    %c2_42 = arith.constant 2 : index
    %c1_43 = arith.constant 1 : index
    %c0_44 = arith.constant 0 : index
    %28 = vector.load %arg2[%c0_40, %c0_41, %c2_42, %c1_43, %c0_44] : memref<1x1x10x10x4xbf16, #tpu.memory_space<vmem>>, vector<1x1x8x8x4xbf16>
    %29 = vector.shape_cast %28 : vector<1x1x8x8x4xbf16> to vector<8x8x4xbf16>
    %30 = vector.shape_cast %29 : vector<8x8x4xbf16> to vector<64x4xbf16>
    %c0_45 = arith.constant 0 : index
    %c28 = arith.constant 28 : index
    %31 = vector.load %arg6[%c0_45, %c28] : memref<64x36xbf16, #tpu.memory_space<vmem>>, vector<64x4xbf16>
    tpu.vector_store %arg6[%c0_45, %c28], %30 {strides = array<i32>} : memref<64x36xbf16, #tpu.memory_space<vmem>>, vector<64x4xbf16>,
    %c0_46 = arith.constant 0 : index
    %c0_47 = arith.constant 0 : index
    %c2_48 = arith.constant 2 : index
    %c2_49 = arith.constant 2 : index
    %c0_50 = arith.constant 0 : index
    %32 = vector.load %arg2[%c0_46, %c0_47, %c2_48, %c2_49, %c0_50] : memref<1x1x10x10x4xbf16, #tpu.memory_space<vmem>>, vector<1x1x8x8x4xbf16>
    %33 = vector.shape_cast %32 : vector<1x1x8x8x4xbf16> to vector<8x8x4xbf16>
    %34 = vector.shape_cast %33 : vector<8x8x4xbf16> to vector<64x4xbf16>
    %c0_51 = arith.constant 0 : index
    %c32 = arith.constant 32 : index
    %35 = vector.load %arg6[%c0_51, %c32] : memref<64x36xbf16, #tpu.memory_space<vmem>>, vector<64x4xbf16>
    tpu.vector_store %arg6[%c0_51, %c32], %34 {strides = array<i32>} : memref<64x36xbf16, #tpu.memory_space<vmem>>, vector<64x4xbf16>,
    %c0_52 = arith.constant 0 : index
    %c0_53 = arith.constant 0 : index
    %36 = vector.load %arg6[%c0_52, %c0_53] : memref<64x36xbf16, #tpu.memory_space<vmem>>, vector<64x36xbf16>
    %c0_54 = arith.constant 0 : index
    %c0_55 = arith.constant 0 : index
    %37 = vector.load %arg3[%c0_54, %c0_55] : memref<36x16xbf16, #tpu.memory_space<vmem>>, vector<36x16xbf16>
    %cst = arith.constant dense<0.000000e+00> : vector<64x16xf32>
    %38 = tpu.matmul %36, %37, %cst {dimension_numbers = #tpu.dot_dimension_numbers<[1], [0], [0], [1], [0, 0, 1, 1], [], []>} : vector<64x36xbf16>, vector<36x16xbf16>, vector<64x16xf32> -> vector<64x16xf32>
    %c0_56 = arith.constant 0 : index
    %c0_57 = arith.constant 0 : index
    %39 = vector.load %arg4[%c0_56, %c0_57] : memref<1x16xf32, #tpu.memory_space<vmem>>, vector<1x16xf32>
    %40 = vector.broadcast %39 : vector<1x16xf32> to vector<64x16xf32>
    %41 = arith.addf %38, %40 : vector<64x16xf32>
    %cst_58 = arith.constant 0.000000e+00 : f32
    %42 = vector.broadcast %cst_58 : f32 to vector<64x16xf32>
    %43 = arith.maximumf %41, %42 : vector<64x16xf32>
    %c0_59 = arith.constant 0 : index
    %c0_60 = arith.constant 0 : index
    %c0_61 = arith.constant 0 : index
    %44 = vector.load %arg5[%c0_59, %c0_60, %c0_61] : memref<1x64x16xf32, #tpu.memory_space<vmem>>, vector<1x64x16xf32>
    %45 = vector.shape_cast %44 : vector<1x64x16xf32> to vector<64x16xf32>
    %46 = vector.shape_cast %43 : vector<64x16xf32> to vector<1x64x16xf32>
    tpu.vector_store %arg5[%c0_59, %c0_60, %c0_61], %46 {strides = array<i32>} : memref<1x64x16xf32, #tpu.memory_space<vmem>>, vector<1x64x16xf32>,
    return
  }
  func.func @transform_0(%arg0: i32, %arg1: i32) -> (i32, i32, i32, i32, i32) {
    %c0_i32 = arith.constant 0 : i32
    %c0_i32_0 = arith.constant 0 : i32
    %c0_i32_1 = arith.constant 0 : i32
    %c0_i32_2 = arith.constant 0 : i32
    return %arg0, %arg1, %c0_i32, %c0_i32_0, %c0_i32_1 : i32, i32, i32, i32, i32
  }
  func.func @transform_1(%arg0: i32, %arg1: i32) -> (i32, i32) {
    %c0_i32 = arith.constant 0 : i32
    %c0_i32_0 = arith.constant 0 : i32
    %c0_i32_1 = arith.constant 0 : i32
    return %c0_i32, %c0_i32_0 : i32, i32
  }
  func.func @transform_2(%arg0: i32, %arg1: i32) -> (i32, i32) {
    %c0_i32 = arith.constant 0 : i32
    %c0_i32_0 = arith.constant 0 : i32
    %c0_i32_1 = arith.constant 0 : i32
    return %c0_i32, %c0_i32_0 : i32, i32
  }
  func.func @transform_3(%arg0: i32, %arg1: i32) -> (i32, i32, i32) {
    %c0_i32 = arith.constant 0 : i32
    %c0_i32_0 = arith.constant 0 : i32
    return %arg0, %arg1, %c0_i32 : i32, i32, i32
  }
}

</mosaic_0001>

<llo_original>
// kernel: tile.8
$region0: #{tile.8}
  #allocation0 [shape = 's32[1]{0}', space=sflag, size = 0x4, scoped, tag = 'scoped memory for tile.8']
  %s0 = inlined_call_operand.vmem [shape: f32[4], index: 0, kind: input, shape index: {}]
  %s1 = inlined_call_operand.vmem [shape: f32[4,4], index: 1, kind: output, shape index: {}]
  // Predicated region
  $region2: #{tile.8} parent=0 // pred_check
    _
  $region3: #{tile.8} parent=0 // pred_check_branch
    %3 = sbr.rel (0) target = $region5
  $region4: #{tile.8} parent=0 // pred_region
    _
  $region5: #{tile.8} parent=0 // pred_fallthru
    _
  %v4 = vld [vmem:[%s0] ss:$0 sm:$0xff]
  %5 = vst [vmem:[%s1] sm:$0xf] %v4

// kernel: tile.9
$region0: #{tile.9}
  %s0 = inlined_call_operand.vmem [shape: f32[4,4], index: 0, kind: input, shape index: {}]
  %s1 = inlined_call_operand.vmem [shape: f32[1,16], index: 1, kind: output, shape index: {}]
  $region1: #{tile.9} parent=0
    #allocation0 [shape = 'u8[4096]{0}', space=vmem, size = 0x1000, scoped, tag = 'scoped mem for output reshape']
    #allocation1 [shape = 'u8[4096]{0}', space=vmem, size = 0x1000, scoped, tag = 'scoped mem for input reshape']
    %s3 = sshllo.u32 0, 4
    %v4 = vld [vmem:[%s0] sm:%s3]
    %5 = vst [vmem:[#allocation1] sm:%s3] %v4
    %v6 = vld [vmem:[#allocation1] sm:$0x1]
    %vm7 = vcmask 31744
    %8 = vst.msk [vmem:[#allocation0] sm:$0x1] %vm7, %v6
    %s9 = scalar_lea.vmem [#allocation1], 3
    %v10 = vld [vmem:[%s9] sm:$0x1]
    %11 = vrot.lane.b32.xlu0 %v10, 12
    %v12 = vpop.permute.xlu0 %11
    %vm13 = vcmask 130144
    %14 = vst.msk [vmem:[#allocation0] sm:$0x1] %vm13, %v12
    %s15 = scalar_lea.vmem [#allocation1], 2
    %v16 = vld [vmem:[%s15] sm:$0x1]
    %17 = vrot.lane.b32.xlu0 %v16, 8
    %v18 = vpop.permute.xlu0 %17
    %vm19 = vcmask 97344
    %20 = vst.msk [vmem:[#allocation0] sm:$0x1] %vm19, %v18
    %s21 = scalar_lea.vmem [#allocation1], 1
    %v22 = vld [vmem:[%s21] sm:$0x1]
    %23 = vrot.lane.b32.xlu0 %v22, 4
    %v24 = vpop.permute.xlu0 %23
    %vm25 = vcmask 64544
    %26 = vst.msk [vmem:[#allocation0] sm:$0x1] %vm25, %v24
    %s28 = sshllo.u32 0, 1
    %v30 = vld [vmem:[#allocation0] sm:%s28]
    %s31 = sshllo.u32 0, 1
    %32 = vst [vmem:[%s1] sm:%s31] %v30

</llo_original>
